<compile_context>
chip_gen: v7x
topology: tpu7x:2x2x1
jax: 0.10.0
libtpu: 0.0.40
codegen_flags: <defaults>
</compile_context>

<pallas_src>
import functools
import math

import jax
import jax.numpy as jnp
from jax.experimental import pallas as pl
from jax.experimental.pallas import tpu as pltpu


def _round_up(x, m):
    return ((x + m - 1) // m) * m


def _pad2(x, rows, cols):
    return jnp.pad(x, ((0, rows - x.shape[0]), (0, cols - x.shape[1])))


def _vmem_capacity_bytes():
    cap = 128 * 1024 * 1024
    try:
        cap = int(getattr(pltpu.get_tpu_info(), "vmem_capacity_bytes", cap))
    except Exception:
        pass
    return cap


# --------------------------------------------------------------------------
# Kernel bodies
# --------------------------------------------------------------------------
def _proj_kernel(x_ref, w_ref, dcol_ref, z_ref):
    """Z = d_col[:, None] * (X @ W); bf16 x bf16 MXU, f32 accumulate."""
    z = jnp.dot(x_ref[...], w_ref[...], preferred_element_type=jnp.float32)
    z_ref[...] = (z * dcol_ref[...]).astype(z_ref.dtype)


def _agg_kernel(a_ref, z_ref, drow_ref, b_ref, o_ref, acc_ref, *,
                relu, tk, z_resident):
    """Y = d_row[:, None] * (A @ Z) + b (optional relu), tiled over A columns."""
    k = pl.program_id(1)

    @pl.when(k == 0)
    def _():
        acc_ref[...] = jnp.zeros_like(acc_ref)

    if z_resident:
        # Z lives fully in VMEM (constant-index block, fetched once); slice the
        # K-tile that matches this A column tile.
        z_tile = z_ref[pl.ds(pl.multiple_of(k * tk, tk), tk), :]
    else:
        z_tile = z_ref[...]

    # bf16 x bf16 -> f32 accumulate on the MXU.
    acc_ref[...] += jnp.dot(a_ref[...], z_tile,
                            preferred_element_type=jnp.float32)

    @pl.when(k == pl.num_programs(1) - 1)
    def _():
        y = acc_ref[...] * drow_ref[...] + b_ref[...]
        if relu:
            y = jnp.maximum(y, 0.0)
        o_ref[...] = y.astype(o_ref.dtype)


# --------------------------------------------------------------------------
# Per-stage pallas_call wrappers
# --------------------------------------------------------------------------
def _project(x_p, w_p, dcol_p, tm_proj, vmem_limit):
    n_rows, f_in = x_p.shape
    f_out = w_p.shape[1]
    flops = 2 * n_rows * f_in * f_out
    bytes_accessed = (n_rows * f_in * 2 + f_in * f_out * 2
                      + n_rows * f_out * 2 + n_rows * 4)
    return pl.pallas_call(
        _proj_kernel,
        out_shape=jax.ShapeDtypeStruct((n_rows, f_out), jnp.bfloat16),
        grid_spec=pltpu.PrefetchScalarGridSpec(
            num_scalar_prefetch=0,
            grid=(n_rows // tm_proj,),
            in_specs=[
                pl.BlockSpec((tm_proj, f_in), lambda i: (i, 0)),
                pl.BlockSpec((f_in, f_out), lambda i: (0, 0)),
                pl.BlockSpec((tm_proj, 1), lambda i: (i, 0)),
            ],
            out_specs=pl.BlockSpec((tm_proj, f_out), lambda i: (i, 0)),
        ),
        compiler_params=pltpu.CompilerParams(
            dimension_semantics=("parallel",),
            vmem_limit_bytes=vmem_limit),
        cost_estimate=pl.CostEstimate(flops=flops, transcendentals=0,
                                      bytes_accessed=int(bytes_accessed)),
    )(x_p, w_p, dcol_p)


def _aggregate(a_p, z_p, d_row_p, b_p, tm, tk, *, relu, out_dtype,
               z_resident, vmem_limit):
    n_row_pad, n_col_pad = a_p.shape
    f_out = z_p.shape[1]
    kernel = functools.partial(_agg_kernel, relu=relu, tk=tk,
                               z_resident=z_resident)

    if z_resident:
        z_spec = pl.BlockSpec((n_col_pad, f_out), lambda i, k: (0, 0))
        z_bytes = n_col_pad * f_out * 2
    else:
        z_spec = pl.BlockSpec((tk, f_out), lambda i, k: (k, 0))
        z_bytes = (n_row_pad // tm) * n_col_pad * f_out * 2

    flops = 2 * n_row_pad * n_col_pad * f_out
    bytes_accessed = (n_row_pad * n_col_pad * 2 + z_bytes
                      + n_row_pad * f_out * jnp.dtype(out_dtype).itemsize
                      + n_row_pad * 4 + f_out * 4)

    return pl.pallas_call(
        kernel,
        out_shape=jax.ShapeDtypeStruct((n_row_pad, f_out), out_dtype),
        grid_spec=pltpu.PrefetchScalarGridSpec(
            num_scalar_prefetch=0,
            grid=(n_row_pad // tm, n_col_pad // tk),
            in_specs=[
                pl.BlockSpec((tm, tk), lambda i, k: (i, k)),       # A tile (bf16)
                z_spec,                                            # Z (bf16)
                pl.BlockSpec((tm, 1), lambda i, k: (i, 0)),        # d_row (f32)
                pl.BlockSpec((1, f_out), lambda i, k: (0, 0)),     # bias  (f32)
            ],
            out_specs=pl.BlockSpec((tm, f_out), lambda i, k: (i, 0)),
            scratch_shapes=[pltpu.VMEM((tm, f_out), jnp.float32)],
        ),
        compiler_params=pltpu.CompilerParams(
            dimension_semantics=("parallel", "arbitrary"),
            vmem_limit_bytes=vmem_limit),
        cost_estimate=pl.CostEstimate(flops=flops, transcendentals=0,
                                      bytes_accessed=int(bytes_accessed)),
    )(a_p, z_p, d_row_p, b_p)


# --------------------------------------------------------------------------
# Tiling / padding plan (generation- and size-dependent, computed once)
# --------------------------------------------------------------------------
def plan_gcn(n, num_features, hidden_dim, num_classes):
    cap = _vmem_capacity_bytes()
    # Explicit scoped-VMEM limit (v5e default 16 MiB is too small for big tiles;
    # v7x only has 64 MiB physical), with headroom for Mosaic internal scratch.
    vmem_limit = min(cap // 2, 64 * 1024 * 1024)
    budget = vmem_limit - 6 * 1024 * 1024

    fp = _round_up(num_features, 128)
    hp = _round_up(hidden_dim, 128)
    cp = _round_up(num_classes, 128)
    f_out_max = max(hp, cp)
    n128 = _round_up(n, 128)

    # Reduction (A-column) tile: big enough to amortize per-grid-step overhead,
    # but <= ~N/4 so column padding stays bounded.
    tk = min(2048, n128, max(128, _round_up(max(n // 4, 1), 128)))
    # Row tile; keep >= 2 row tiles where possible (v7x megacore sharding).
    tm = min(1024, n128)
    while tm > 128 and _round_up(n, tm) // tm < 2:
        tm = max(128, tm // 2)

    def agg_bytes(tm_, tk_, z_res):
        n_col = _round_up(n, tk_)
        a_b = 2 * tm_ * tk_ * 2                                   # A, dbl-buf
        z_b = 2 * (n_col if z_res else tk_) * f_out_max * 2       # Z
        o_b = 2 * tm_ * f_out_max * 4 + tm_ * f_out_max * 4       # out + acc
        d_b = 2 * tm_ * 128 * 4 + 2 * 8 * f_out_max * 4           # d_row + bias
        return a_b + z_b + o_b + d_b

    # Shrink tiles if even the streamed-Z variant would not fit the budget.
    while agg_bytes(tm, tk, False) > budget and tk > 128:
        tk = max(128, tk // 2)
    while agg_bytes(tm, tk, False) > budget and tm > 128:
        tm = max(128, tm // 2)

    z_resident = agg_bytes(tm, tk, True) <= budget

    n_row_pad = _round_up(n, tm)
    n_col_pad = _round_up(n, tk)
    # Projection uses its own (smaller) row tile that divides n_col_pad.
    tm_proj = math.gcd(512, n_col_pad)

    return dict(tm=tm, tk=tk, tm_proj=tm_proj, fp=fp, hp=hp, cp=cp,
                n_row_pad=n_row_pad, n_col_pad=n_col_pad,
                z_resident=z_resident, vmem_limit=vmem_limit)


def preprocess_graph(a_bin, d_inv_sqrt, cfg):
    """Pad / cast the graph once; cache the result across forward passes."""
    n = a_bin.shape[0]
    a_p = _pad2(a_bin.astype(jnp.bfloat16), cfg["n_row_pad"], cfg["n_col_pad"])
    d = d_inv_sqrt.astype(jnp.float32).reshape(n, 1)
    d_row_p = _pad2(d, cfg["n_row_pad"], 1)
    d_col_p = _pad2(d, cfg["n_col_pad"], 1)
    return a_p, d_row_p, d_col_p


# --------------------------------------------------------------------------
# Full forward pass
# --------------------------------------------------------------------------
def gcn_forward(a_p, d_row_p, d_col_p, x, w1, b1, w2, b2, cfg):
    n_row_pad, n_col_pad = a_p.shape
    n = x.shape[0]
    c = w2.shape[1]
    fp, hp, cp = cfg["fp"], cfg["hp"], cfg["cp"]
    tm, tk, tm_proj = cfg["tm"], cfg["tk"], cfg["tm_proj"]
    vmem_limit = cfg["vmem_limit"]
    z_res = cfg["z_resident"]

    # Parameters / features in bf16 for the MXU (f32 bias kept for the epilogue).
    x_p = _pad2(x.astype(jnp.bfloat16), n_col_pad, fp)
    w1_p = _pad2(w1.astype(jnp.bfloat16), fp, hp)
    b1_p = _pad2(b1.reshape(1, -1).astype(jnp.float32), 1, hp)
    w2_p = _pad2(w2.astype(jnp.bfloat16), hp, cp)
    b2_p = _pad2(b2.reshape(1, -1).astype(jnp.float32), 1, cp)

    # Layer 1: H = relu(d * (A @ (d * (X @ W1))) + b1)
    z1 = _project(x_p, w1_p, d_col_p, tm_proj, vmem_limit)
    h1 = _aggregate(a_p, z1, d_row_p, b1_p, tm, tk, relu=True,
                    out_dtype=jnp.bfloat16, z_resident=z_res,
                    vmem_limit=vmem_limit)

    # H lives in "row space" (n_row_pad); layer-2 projection needs "col space"
    # (n_col_pad).  Rows >= n are harmless either way (A's padded cols are 0).
    if n_col_pad > n_row_pad:
        h_in = jnp.pad(h1, ((0, n_col_pad - n_row_pad), (0, 0)))
    else:
        h_in = h1[:n_col_pad]

    # Layer 2: OUT = d * (A @ (d * (H @ W2))) + b2
    z2 = _project(h_in, w2_p, d_col_p, tm_proj, vmem_limit)
    out = _aggregate(a_p, z2, d_row_p, b2_p, tm, tk, relu=False,
                     out_dtype=jnp.float32, z_resident=z_res,
                     vmem_limit=vmem_limit)
    return out[:n, :c]


# --------------------------------------------------------------------------
# Graph construction (JAX glue, not the hot path) and f32 reference
# --------------------------------------------------------------------------
def build_graph(edge_index, num_nodes):
    """Binary adjacency (with self-loops, bf16-exact 0/1) and D^{-1/2}.

    Edge (src=j, dst=i) means message j -> i, i.e. A[i, j] = 1.
    Note: duplicate edges are deduplicated (set, not add) — differs from
    torch_geometric's gcn_norm only on multigraphs.
    """
    src, dst = edge_index[0], edge_index[1]
    loops = jnp.arange(num_nodes, dtype=edge_index.dtype)
    src = jnp.concatenate([src, loops])
    dst = jnp.concatenate([dst, loops])
    a = jnp.zeros((num_nodes, num_nodes), jnp.float32).at[dst, src].set(1.0)
    deg = a.sum(axis=1)
    d_inv_sqrt = jnp.where(deg > 0, 1.0 / jnp.sqrt(deg), 0.0)
    return a.astype(jnp.bfloat16), d_inv_sqrt.astype(jnp.float32)


def gcn_reference(a_bin, d_inv_sqrt, x, w1, b1, w2, b2):
    a_hat = (a_bin.astype(jnp.float32)
             * d_inv_sqrt[:, None] * d_inv_sqrt[None, :])
    h = jnp.maximum(a_hat @ x @ w1 + b1, 0.0)
    return a_hat @ h @ w2 + b2


if __name__ == "__main__":
    key = jax.random.PRNGKey(0)
    k_x, k_e1, k_e2, k_w1, k_b1, k_w2, k_b2 = jax.random.split(key, 7)

    # Small synthetic graph / model sizes.
    num_nodes = 16
    num_features = 8
    hidden_dim = 32
    num_classes = 4
    num_edges = 40

    x = jax.random.normal(k_x, (num_nodes, num_features), jnp.float32)
    src = jax.random.randint(k_e1, (num_edges,), 0, num_nodes, jnp.int32)
    dst = jax.random.randint(k_e2, (num_edges,), 0, num_nodes, jnp.int32)
    edge_index = jnp.stack([src, dst], axis=0)        # (2, E)

    # GCNConv parameters: weight (in, out), bias (out,) -> kept as (1, out).
    w1 = jax.random.normal(k_w1, (num_features, hidden_dim), jnp.float32) * 0.1
    b1 = jax.random.normal(k_b1, (1, hidden_dim), jnp.float32) * 0.1
    w2 = jax.random.normal(k_w2, (hidden_dim, num_classes), jnp.float32) * 0.1
    b2 = jax.random.normal(k_b2, (1, num_classes), jnp.float32) * 0.1

    a_bin, d_inv_sqrt = build_graph(edge_index, num_nodes)

    # Plan + graph preprocessing done once (cache across forwards).
    cfg = plan_gcn(num_nodes, num_features, hidden_dim, num_classes)
    a_p, d_row_p, d_col_p = preprocess_graph(a_bin, d_inv_sqrt, cfg)

    out = gcn_forward(a_p, d_row_p, d_col_p, x, w1, b1, w2, b2, cfg)
    out = jax.block_until_ready(out)

    ref = gcn_reference(a_bin, d_inv_sqrt, x, w1, b1, w2, b2)
    assert out.shape == (num_nodes, num_classes)
    # bf16 MXU path for A / X / H / projected features -> bf16-level tolerance.
    assert jnp.allclose(out, ref, atol=2e-2, rtol=2e-2), (
        float(jnp.max(jnp.abs(out - ref))))

    print("KERNEL_OK")
</pallas_src>

<mosaic_0001>
module attributes {stable_mosaic.version = 11 : i64} {
  func.func @_proj_kernel(%arg0: i32, %arg1: memref<128x128xbf16, #tpu.memory_space<vmem>>, %arg2: memref<128x128xbf16, #tpu.memory_space<vmem>>, %arg3: memref<128x1xf32, #tpu.memory_space<vmem>>, %arg4: memref<128x128xbf16, #tpu.memory_space<vmem>>) attributes {dimension_semantics = [#tpu.dimension_semantics<parallel>], iteration_bounds = array<i64: 1>, scalar_prefetch = 0 : i64, scratch_operands = 0 : i64, tpu.core_type = #tpu.core_type<tc>, window_params = [{transform_indices = @transform_0, window_bounds = array<i64: 128, 128>}, {pipeline_mode = #tpu.pipeline_mode<synchronous>, transform_indices = @transform_1, window_bounds = array<i64: 128, 128>}, {transform_indices = @transform_2, window_bounds = array<i64: 128, 1>}, {transform_indices = @transform_3, window_bounds = array<i64: 128, 128>}]} {
    %c0 = arith.constant 0 : index
    %c0_0 = arith.constant 0 : index
    %0 = vector.load %arg1[%c0, %c0_0] : memref<128x128xbf16, #tpu.memory_space<vmem>>, vector<128x128xbf16>
    %c0_1 = arith.constant 0 : index
    %c0_2 = arith.constant 0 : index
    %1 = vector.load %arg2[%c0_1, %c0_2] : memref<128x128xbf16, #tpu.memory_space<vmem>>, vector<128x128xbf16>
    %cst = arith.constant dense<0.000000e+00> : vector<128x128xf32>
    %2 = tpu.matmul %0, %1, %cst {dimension_numbers = #tpu.dot_dimension_numbers<[1], [0], [0], [1], [0, 0, 1, 1], [], []>} : vector<128x128xbf16>, vector<128x128xbf16>, vector<128x128xf32> -> vector<128x128xf32>
    %c0_3 = arith.constant 0 : index
    %c0_4 = arith.constant 0 : index
    %3 = vector.load %arg3[%c0_3, %c0_4] : memref<128x1xf32, #tpu.memory_space<vmem>>, vector<128x1xf32>
    %4 = vector.broadcast %3 : vector<128x1xf32> to vector<128x128xf32>
    %5 = arith.mulf %2, %4 : vector<128x128xf32>
    %6 = arith.truncf %5 : vector<128x128xf32> to vector<128x128xbf16>
    %c0_5 = arith.constant 0 : index
    %c0_6 = arith.constant 0 : index
    %7 = vector.load %arg4[%c0_5, %c0_6] : memref<128x128xbf16, #tpu.memory_space<vmem>>, vector<128x128xbf16>
    tpu.vector_store %arg4[%c0_5, %c0_6], %6 {strides = array<i32>} : memref<128x128xbf16, #tpu.memory_space<vmem>>, vector<128x128xbf16>,
    return
  }
  func.func @transform_0(%arg0: i32) -> (i32, i32) {
    %c0_i32 = arith.constant 0 : i32
    %c0_i32_0 = arith.constant 0 : i32
    return %arg0, %c0_i32 : i32, i32
  }
  func.func @transform_1(%arg0: i32) -> (i32, i32) {
    %c0_i32 = arith.constant 0 : i32
    %c0_i32_0 = arith.constant 0 : i32
    %c0_i32_1 = arith.constant 0 : i32
    return %c0_i32, %c0_i32_0 : i32, i32
  }
  func.func @transform_2(%arg0: i32) -> (i32, i32) {
    %c0_i32 = arith.constant 0 : i32
    %c0_i32_0 = arith.constant 0 : i32
    return %arg0, %c0_i32 : i32, i32
  }
  func.func @transform_3(%arg0: i32) -> (i32, i32) {
    %c0_i32 = arith.constant 0 : i32
    %c0_i32_0 = arith.constant 0 : i32
    return %arg0, %c0_i32 : i32, i32
  }
}

</mosaic_0001>

<llo_original>
// kernel: tpu_custom_call.1
$region0: #{tpu_custom_call.1}
  #allocation0 [shape = 'u32[]', space=smem, size = 0x4, offset = 0x4, fixed_abs, tag = 'smem constant byte address 0x4 - core index']
  #allocation1 [shape = 'u32[144,128]{1,0:T(1,128)}', space=vmem, size = 0x12000, scoped, tag = 'internal scratch']
  %s0 = inlined_call_operand.hbm [shape: bf16[128,128], index: 0, kind: input, shape index: {}]
  %s1 = inlined_call_operand.hbm [shape: bf16[128,128], index: 1, kind: input, shape index: {}]
  %s2 = inlined_call_operand.hbm [shape: f32[128,1], index: 2, kind: input, shape index: {}]
  %s3 = inlined_call_operand.hbm [shape: bf16[128,128], index: 3, kind: output, shape index: {}]
  %s4 = sld [smem:[#allocation0]]
  $region34: #{tpu_custom_call.1} parent=0
    _
  %s6 = ssub.s32 1, %s4
  %s7 = scalar_select 0, %s6, %s4
  $region1: #{tpu_custom_call.1} parent=0
    #allocation2 [shape = 'u8[32768]{0}', space=vmem, size = 0x8000, scoped, tag = 'input window, operand 0, single buffered']
    #allocation3 [shape = 's32[1]{0}', space=sflag, size = 0x4, scoped, tag = 'scoped memory for tpu_custom_call.1']
    #allocation4 [shape = 's32[1]{0}', space=sflag, size = 0x4, scoped, tag = 'scoped memory for tpu_custom_call.1']
    #allocation5 [shape = 'u8[32768]{0}', space=vmem, size = 0x8000, scoped, tag = 'input window, operand 1, single buffered']
    #allocation6 [shape = 's32[1]{0}', space=sflag, size = 0x4, scoped, tag = 'scoped memory for tpu_custom_call.1']
    #allocation7 [shape = 'u8[65536]{0}', space=vmem, size = 0x10000, scoped, tag = 'input window, operand 2, single buffered']
    #allocation8 [shape = 'u8[32768]{0}', space=vmem, size = 0x8000, scoped, tag = 'output window, operand 0, single buffered']
    %8 = vsyncpa [#allocation3], 0
    %9 = vsyncpa [#allocation6], 0
    %10 = vsyncpa [#allocation4], 0
    // Predicated region
    $region2: #{tpu_custom_call.1} parent=1 // pred_check
      _
    $region3: #{tpu_custom_call.1} parent=1 // pred_check_branch
      %12 = sbr.rel (0) target = $region5
    $region4: #{tpu_custom_call.1} parent=1 // pred_region
      %s14 = ssub.s32 1024, 1024
      %15 = vsyncadd [#allocation3], %s14
      %s16 = sshll.u32 [#allocation2], 4
      %s17 = int_to_ptr.vmem [resolvable:$true] %s16
      %22 = dma.hbm_to_vmem [thread:$0]  %s0, 1024, %s17, [#allocation3], 64, 64, 4
    $region5: #{tpu_custom_call.1} parent=1 // pred_fallthru
      _
    // Predicated region
    $region6: #{tpu_custom_call.1} parent=1 // pred_check
      _
    $region7: #{tpu_custom_call.1} parent=1 // pred_check_branch
      %24 = sbr.rel (0) target = $region9
    $region8: #{tpu_custom_call.1} parent=1 // pred_region
      %s26 = ssub.s32 1024, 1024
      %27 = vsyncadd [#allocation6], %s26
      %s28 = sshll.u32 [#allocation5], 4
      %s29 = int_to_ptr.vmem [resolvable:$true] %s28
      %34 = dma.hbm_to_vmem [thread:$0]  %s1, 1024, %s29, [#allocation6], 64, 64, 4
    $region9: #{tpu_custom_call.1} parent=1 // pred_fallthru
      _
    // Predicated region
    $region10: #{tpu_custom_call.1} parent=1 // pred_check
      _
    $region11: #{tpu_custom_call.1} parent=1 // pred_check_branch
      %36 = sbr.rel (0) target = $region13
    $region12: #{tpu_custom_call.1} parent=1 // pred_region
      %s38 = ssub.s32 2048, 2048
      %39 = vsyncadd [#allocation6], %s38
      %s40 = sshll.u32 [#allocation7], 4
      %s41 = int_to_ptr.vmem [resolvable:$true] %s40
      %46 = dma.hbm_to_vmem [thread:$0]  %s2, 2048, %s41, [#allocation6], 128, 128, 8
    $region13: #{tpu_custom_call.1} parent=1 // pred_fallthru
      _
    // Predicated region
    $region14: #{tpu_custom_call.1} parent=1 // pred_check
      _
    $region15: #{tpu_custom_call.1} parent=1 // pred_check_branch
      %48 = sbr.rel (0) target = $region17
    $region16: #{tpu_custom_call.1} parent=1 // pred_region
      %49 = dma.done [#allocation3], 1024
    $region17: #{tpu_custom_call.1} parent=1 // pred_fallthru
      _
    // Predicated region
    $region18: #{tpu_custom_call.1} parent=1 // pred_check
      _
    $region19: #{tpu_custom_call.1} parent=1 // pred_check_branch
      %51 = sbr.rel (0) target = $region21
    $region20: #{tpu_custom_call.1} parent=1 // pred_region
      %52 = dma.done [#allocation6], 1024
    $region21: #{tpu_custom_call.1} parent=1 // pred_fallthru
      _
    // Predicated region
    $region22: #{tpu_custom_call.1} parent=1 // pred_check
      _
    $region23: #{tpu_custom_call.1} parent=1 // pred_check_branch
      %54 = sbr.rel (0) target = $region25
    $region24: #{tpu_custom_call.1} parent=1 // pred_region
      %55 = dma.done [#allocation6], 2048
    $region25: #{tpu_custom_call.1} parent=1 // pred_fallthru
      _
    %v57 = vld [vmem:[#allocation2] sm:$0xf]
    %v58 = vld [vmem:[#allocation2 + $0x4] sm:$0xf]
    %v59 = vld [vmem:[#allocation2 + $0x8] sm:$0xf]
    %v60 = vld [vmem:[#allocation2 + $0xc] sm:$0xf]
    %v61 = vld [vmem:[#allocation2 + $0x10] sm:$0xf]
    %v62 = vld [vmem:[#allocation2 + $0x14] sm:$0xf]
    %v63 = vld [vmem:[#allocation2 + $0x18] sm:$0xf]
    %v64 = vld [vmem:[#allocation2 + $0x1c] sm:$0xf]
    %v65 = vld [vmem:[#allocation2 + $0x20] sm:$0xf]
    %v66 = vld [vmem:[#allocation2 + $0x24] sm:$0xf]
    %v67 = vld [vmem:[#allocation2 + $0x28] sm:$0xf]
    %v68 = vld [vmem:[#allocation2 + $0x2c] sm:$0xf]
    %v69 = vld [vmem:[#allocation2 + $0x30] sm:$0xf]
    %v70 = vld [vmem:[#allocation2 + $0x34] sm:$0xf]
    %v71 = vld [vmem:[#allocation2 + $0x38] sm:$0xf]
    %v72 = vld [vmem:[#allocation2 + $0x3c] sm:$0xf]
    %v73 = vld [vmem:[#allocation5] sm:$0xf]
    %v74 = vld [vmem:[#allocation5 + $0x4] sm:$0xf]
    %v75 = vld [vmem:[#allocation5 + $0x8] sm:$0xf]
    %v76 = vld [vmem:[#allocation5 + $0xc] sm:$0xf]
    %v77 = vld [vmem:[#allocation5 + $0x10] sm:$0xf]
    %v78 = vld [vmem:[#allocation5 + $0x14] sm:$0xf]
    %v79 = vld [vmem:[#allocation5 + $0x18] sm:$0xf]
    %v80 = vld [vmem:[#allocation5 + $0x1c] sm:$0xf]
    %v81 = vld [vmem:[#allocation5 + $0x20] sm:$0xf]
    %v82 = vld [vmem:[#allocation5 + $0x24] sm:$0xf]
    %v83 = vld [vmem:[#allocation5 + $0x28] sm:$0xf]
    %v84 = vld [vmem:[#allocation5 + $0x2c] sm:$0xf]
    %v85 = vld [vmem:[#allocation5 + $0x30] sm:$0xf]
    %v86 = vld [vmem:[#allocation5 + $0x34] sm:$0xf]
    %v87 = vld [vmem:[#allocation5 + $0x38] sm:$0xf]
    %v88 = vld [vmem:[#allocation5 + $0x3c] sm:$0xf]
    %v105 = vunpack.c.l.b16 %v57
    %v106 = vunpack.c.l.b16 %v58
    %v107 = vunpack.c.l.b16 %v59
    %v108 = vunpack.c.l.b16 %v60
    %v109 = vunpack.c.l.b16 %v61
    %v110 = vunpack.c.l.b16 %v62
    %v111 = vunpack.c.l.b16 %v63
    %v112 = vunpack.c.l.b16 %v64
    %v113 = vunpack.c.l.b16 %v65
    %v114 = vunpack.c.l.b16 %v66
    %v115 = vunpack.c.l.b16 %v67
    %v116 = vunpack.c.l.b16 %v68
    %v117 = vunpack.c.l.b16 %v69
    %v118 = vunpack.c.l.b16 %v70
    %v119 = vunpack.c.l.b16 %v71
    %v120 = vunpack.c.l.b16 %v72
    %v121 = vpack.c.b16 %v106, %v105
    %v122 = vpack.c.b16 %v108, %v107
    %v123 = vpack.c.b16 %v110, %v109
    %v124 = vpack.c.b16 %v112, %v111
    %v125 = vpack.c.b16 %v114, %v113
    %v126 = vpack.c.b16 %v116, %v115
    %v127 = vpack.c.b16 %v118, %v117
    %v128 = vpack.c.b16 %v120, %v119
    %v153 = vunpack.c.l.b16 %v73
    %v154 = vunpack.c.l.b16 %v74
    %v155 = vunpack.c.l.b16 %v75
    %v156 = vunpack.c.l.b16 %v76
    %v157 = vunpack.c.l.b16 %v77
    %v158 = vunpack.c.l.b16 %v78
    %v159 = vunpack.c.l.b16 %v79
    %v160 = vunpack.c.l.b16 %v80
    %v161 = vunpack.c.l.b16 %v81
    %v162 = vunpack.c.l.b16 %v82
    %v163 = vunpack.c.l.b16 %v83
    %v164 = vunpack.c.l.b16 %v84
    %v165 = vunpack.c.l.b16 %v85
    %v166 = vunpack.c.l.b16 %v86
    %v167 = vunpack.c.l.b16 %v87
    %v168 = vunpack.c.l.b16 %v88
    %v169 = vpack.c.b16 %v154, %v153
    %v170 = vpack.c.b16 %v156, %v155
    %v171 = vpack.c.b16 %v158, %v157
    %v172 = vpack.c.b16 %v160, %v159
    %v173 = vpack.c.b16 %v162, %v161
    %v174 = vpack.c.b16 %v164, %v163
    %v175 = vpack.c.b16 %v166, %v165
    %v176 = vpack.c.b16 %v168, %v167
    %185 = vmatprep.subr.bf16.mxu0 0
    %186 = vmatpush1.bf16.msra.mxu0 %v169
    %187 = vmatprep.subr.bf16.mxu0 0
    %188 = vmatpush1.bf16.msra.mxu0 %v170
    %189 = vmatprep.subr.bf16.mxu0 0
    %190 = vmatpush1.bf16.msra.mxu0 %v171
    %191 = vmatprep.subr.bf16.mxu0 0
    %192 = vmatpush1.bf16.msra.mxu0 %v172
    %193 = vmatprep.subr.bf16.mxu0 0
    %194 = vmatpush1.bf16.msra.mxu0 %v173
    %195 = vmatprep.subr.bf16.mxu0 0
    %196 = vmatpush1.bf16.msra.mxu0 %v174
    %197 = vmatprep.subr.bf16.mxu0 0
    %198 = vmatpush1.bf16.msra.mxu0 %v175
    %199 = vmatprep.subr.bf16.mxu0 0
    %200 = vmatpush1.bf16.msra.mxu0 %v176
    %201 = vmatprep.subr.bf16.mxu0 0
    %202 = vmatpush1.bf16.msra.mxu0 0
    %203 = vmatprep.subr.bf16.mxu0 0
    %204 = vmatpush1.bf16.msra.mxu0 0
    %205 = vmatprep.subr.bf16.mxu0 0
    %206 = vmatpush1.bf16.msra.mxu0 0
    %207 = vmatprep.subr.bf16.mxu0 0
    %208 = vmatpush1.bf16.msra.mxu0 0
    %209 = vmatprep.subr.bf16.mxu0 0
    %210 = vmatpush1.bf16.msra.mxu0 0
    %211 = vmatprep.subr.bf16.mxu0 0
    %212 = vmatpush1.bf16.msra.mxu0 0
    %213 = vmatprep.subr.bf16.mxu0 0
    %214 = vmatpush1.bf16.msra.mxu0 0
    %215 = vmatprep.subr.bf16.mxu0 0
    %216 = vmatpush1.bf16.msra.mxu0 0
    %217 = vmatprep.mubr.bf16.mxu0 0
    %218 = vmatmul.mubr.bf16.gmra.mrb[0].mxu0 %v121
    %v219 = vpop.f32.mrb[0].mxu0
    %v220 = vadd.f32 0.0, %v219
    %v221 = vpop.f32.mrb[0].mxu0
    %v222 = vpop.f32.mrb[0].mxu0
    %v223 = vadd.f32 0.0, %v222
    %v224 = vpop.f32.mrb[0].mxu0
    %225 = vmatprep.mubr.bf16.mxu0 0
    %226 = vmatmul.mubr.bf16.gmra.mrb[0].mxu0 %v122
    %v227 = vpop.f32.mrb[0].mxu0
    %v228 = vadd.f32 0.0, %v227
    %v229 = vpop.f32.mrb[0].mxu0
    %v230 = vpop.f32.mrb[0].mxu0
    %v231 = vadd.f32 0.0, %v230
    %v232 = vpop.f32.mrb[0].mxu0
    %233 = vmatprep.mubr.bf16.mxu0 0
    %234 = vmatmul.mubr.bf16.gmra.mrb[0].mxu0 %v123
    %v235 = vpop.f32.mrb[0].mxu0
    %v236 = vadd.f32 0.0, %v235
    %v237 = vpop.f32.mrb[0].mxu0
    %v238 = vpop.f32.mrb[0].mxu0
    %v239 = vadd.f32 0.0, %v238
    %v240 = vpop.f32.mrb[0].mxu0
    %241 = vmatprep.mubr.bf16.mxu0 0
    %242 = vmatmul.mubr.bf16.gmra.mrb[0].mxu0 %v124
    %v243 = vpop.f32.mrb[0].mxu0
    %v244 = vadd.f32 0.0, %v243
    %v245 = vpop.f32.mrb[0].mxu0
    %v246 = vpop.f32.mrb[0].mxu0
    %v247 = vadd.f32 0.0, %v246
    %v248 = vpop.f32.mrb[0].mxu0
    %249 = vmatprep.mubr.bf16.mxu0 0
    %250 = vmatmul.mubr.bf16.gmra.mrb[0].mxu0 %v125
    %v251 = vpop.f32.mrb[0].mxu0
    %v252 = vadd.f32 0.0, %v251
    %v253 = vpop.f32.mrb[0].mxu0
    %v254 = vpop.f32.mrb[0].mxu0
    %v255 = vadd.f32 0.0, %v254
    %v256 = vpop.f32.mrb[0].mxu0
    %257 = vmatprep.mubr.bf16.mxu0 0
    %258 = vmatmul.mubr.bf16.gmra.mrb[0].mxu0 %v126
    %v259 = vpop.f32.mrb[0].mxu0
    %v260 = vadd.f32 0.0, %v259
    %v261 = vpop.f32.mrb[0].mxu0
    %v262 = vpop.f32.mrb[0].mxu0
    %v263 = vadd.f32 0.0, %v262
    %v264 = vpop.f32.mrb[0].mxu0
    %265 = vmatprep.mubr.bf16.mxu0 0
    %266 = vmatmul.mubr.bf16.gmra.mrb[0].mxu0 %v127
    %v267 = vpop.f32.mrb[0].mxu0
    %v268 = vadd.f32 0.0, %v267
    %v269 = vpop.f32.mrb[0].mxu0
    %v270 = vpop.f32.mrb[0].mxu0
    %v271 = vadd.f32 0.0, %v270
    %v272 = vpop.f32.mrb[0].mxu0
    %273 = vmatprep.mubr.bf16.mxu0 0
    %274 = vmatmul.mubr.bf16.gmra.mrb[0].mxu0 %v128
    %v275 = vpop.f32.mrb[0].mxu0
    %v276 = vadd.f32 0.0, %v275
    %v277 = vpop.f32.mrb[0].mxu0
    %v278 = vpop.f32.mrb[0].mxu0
    %v279 = vadd.f32 0.0, %v278
    %v280 = vpop.f32.mrb[0].mxu0
    %281 = vdwg.mxu0
    %v282 = vld [vmem:[#allocation7] sm:$0xff]
    %v283 = vld [vmem:[#allocation7 + $0x8] sm:$0xff]
    %v284 = vld [vmem:[#allocation7 + $0x10] sm:$0xff]
    %v285 = vld [vmem:[#allocation7 + $0x18] sm:$0xff]
    %v286 = vld [vmem:[#allocation7 + $0x20] sm:$0xff]
    %v287 = vld [vmem:[#allocation7 + $0x28] sm:$0xff]
    %v288 = vld [vmem:[#allocation7 + $0x30] sm:$0xff]
    %v289 = vld [vmem:[#allocation7 + $0x38] sm:$0xff]
    %v290 = vld [vmem:[#allocation7 + $0x40] sm:$0xff]
    %v291 = vld [vmem:[#allocation7 + $0x48] sm:$0xff]
    %v292 = vld [vmem:[#allocation7 + $0x50] sm:$0xff]
    %v293 = vld [vmem:[#allocation7 + $0x58] sm:$0xff]
    %v294 = vld [vmem:[#allocation7 + $0x60] sm:$0xff]
    %v295 = vld [vmem:[#allocation7 + $0x68] sm:$0xff]
    %v296 = vld [vmem:[#allocation7 + $0x70] sm:$0xff]
    %v297 = vld [vmem:[#allocation7 + $0x78] sm:$0xff]
    %299 = vset.pattern.permute.xlu0 0
    %300 = vperm.xlu0 %299, %v282
    %v301 = vpop.permute.xlu0 %300
    %304 = vset.pattern.permute.xlu0 0
    %305 = vperm.xlu0 %304, %v283
    %v306 = vpop.permute.xlu0 %305
    %309 = vset.pattern.permute.xlu0 0
    %310 = vperm.xlu0 %309, %v284
    %v311 = vpop.permute.xlu0 %310
    %314 = vset.pattern.permute.xlu0 0
    %315 = vperm.xlu0 %314, %v285
    %v316 = vpop.permute.xlu0 %315
    %319 = vset.pattern.permute.xlu0 0
    %320 = vperm.xlu0 %319, %v286
    %v321 = vpop.permute.xlu0 %320
    %324 = vset.pattern.permute.xlu0 0
    %325 = vperm.xlu0 %324, %v287
    %v326 = vpop.permute.xlu0 %325
    %329 = vset.pattern.permute.xlu0 0
    %330 = vperm.xlu0 %329, %v288
    %v331 = vpop.permute.xlu0 %330
    %334 = vset.pattern.permute.xlu0 0
    %335 = vperm.xlu0 %334, %v289
    %v336 = vpop.permute.xlu0 %335
    %339 = vset.pattern.permute.xlu0 0
    %340 = vperm.xlu0 %339, %v290
    %v341 = vpop.permute.xlu0 %340
    %344 = vset.pattern.permute.xlu0 0
    %345 = vperm.xlu0 %344, %v291
    %v346 = vpop.permute.xlu0 %345
    %349 = vset.pattern.permute.xlu0 0
    %350 = vperm.xlu0 %349, %v292
    %v351 = vpop.permute.xlu0 %350
    %354 = vset.pattern.permute.xlu0 0
    %355 = vperm.xlu0 %354, %v293
    %v356 = vpop.permute.xlu0 %355
    %359 = vset.pattern.permute.xlu0 0
    %360 = vperm.xlu0 %359, %v294
    %v361 = vpop.permute.xlu0 %360
    %364 = vset.pattern.permute.xlu0 0
    %365 = vperm.xlu0 %364, %v295
    %v366 = vpop.permute.xlu0 %365
    %369 = vset.pattern.permute.xlu0 0
    %370 = vperm.xlu0 %369, %v296
    %v371 = vpop.permute.xlu0 %370
    %374 = vset.pattern.permute.xlu0 0
    %375 = vperm.xlu0 %374, %v297
    %v376 = vpop.permute.xlu0 %375
    %v378 = vmul.f32 %v220, %v301
    %v379 = vmul.f32 %v223, %v306
    %v380 = vmul.f32 %v228, %v311
    %v381 = vmul.f32 %v231, %v316
    %v382 = vmul.f32 %v236, %v321
    %v383 = vmul.f32 %v239, %v326
    %v384 = vmul.f32 %v244, %v331
    %v385 = vmul.f32 %v247, %v336
    %v386 = vmul.f32 %v252, %v341
    %v387 = vmul.f32 %v255, %v346
    %v388 = vmul.f32 %v260, %v351
    %v389 = vmul.f32 %v263, %v356
    %v390 = vmul.f32 %v268, %v361
    %v391 = vmul.f32 %v271, %v366
    %v392 = vmul.f32 %v276, %v371
    %v393 = vmul.f32 %v279, %v376
    %v394 = vpack.c.bf16 %v379, %v378
    %v395 = vpack.c.bf16 %v381, %v380
    %v396 = vpack.c.bf16 %v383, %v382
    %v397 = vpack.c.bf16 %v385, %v384
    %v398 = vpack.c.bf16 %v387, %v386
    %v399 = vpack.c.bf16 %v389, %v388
    %v400 = vpack.c.bf16 %v391, %v390
    %v401 = vpack.c.bf16 %v393, %v392
    %v410 = vunpack.c.l.b16 %v394
    %v411 = vunpack.c.h.b16 %v394
    %v412 = vunpack.c.l.b16 %v395
    %v413 = vunpack.c.h.b16 %v395
    %v414 = vunpack.c.l.b16 %v396
    %v415 = vunpack.c.h.b16 %v396
    %v416 = vunpack.c.l.b16 %v397
    %v417 = vunpack.c.h.b16 %v397
    %v418 = vunpack.c.l.b16 %v398
    %v419 = vunpack.c.h.b16 %v398
    %v420 = vunpack.c.l.b16 %v399
    %v421 = vunpack.c.h.b16 %v399
    %v422 = vunpack.c.l.b16 %v400
    %v423 = vunpack.c.h.b16 %v400
    %v424 = vunpack.c.l.b16 %v401
    %v425 = vunpack.c.h.b16 %v401
    %v426 = vpack.c.b16 %v410, %v410
    %v427 = vpack.c.b16 %v411, %v411
    %v428 = vpack.c.b16 %v412, %v412
    %v429 = vpack.c.b16 %v413, %v413
    %v430 = vpack.c.b16 %v414, %v414
    %v431 = vpack.c.b16 %v415, %v415
    %v432 = vpack.c.b16 %v416, %v416
    %v433 = vpack.c.b16 %v417, %v417
    %v434 = vpack.c.b16 %v418, %v418
    %v435 = vpack.c.b16 %v419, %v419
    %v436 = vpack.c.b16 %v420, %v420
    %v437 = vpack.c.b16 %v421, %v421
    %v438 = vpack.c.b16 %v422, %v422
    %v439 = vpack.c.b16 %v423, %v423
    %v440 = vpack.c.b16 %v424, %v424
    %v441 = vpack.c.b16 %v425, %v425
    %458 = vst [vmem:[#allocation8] sm:$0xf] %v426
    %459 = vst [vmem:[#allocation8 + $0x4] sm:$0xf] %v427
    %460 = vst [vmem:[#allocation8 + $0x8] sm:$0xf] %v428
    %461 = vst [vmem:[#allocation8 + $0xc] sm:$0xf] %v429
    %462 = vst [vmem:[#allocation8 + $0x10] sm:$0xf] %v430
    %463 = vst [vmem:[#allocation8 + $0x14] sm:$0xf] %v431
    %464 = vst [vmem:[#allocation8 + $0x18] sm:$0xf] %v432
    %465 = vst [vmem:[#allocation8 + $0x1c] sm:$0xf] %v433
    %466 = vst [vmem:[#allocation8 + $0x20] sm:$0xf] %v434
    %467 = vst [vmem:[#allocation8 + $0x24] sm:$0xf] %v435
    %468 = vst [vmem:[#allocation8 + $0x28] sm:$0xf] %v436
    %469 = vst [vmem:[#allocation8 + $0x2c] sm:$0xf] %v437
    %470 = vst [vmem:[#allocation8 + $0x30] sm:$0xf] %v438
    %471 = vst [vmem:[#allocation8 + $0x34] sm:$0xf] %v439
    %472 = vst [vmem:[#allocation8 + $0x38] sm:$0xf] %v440
    %473 = vst [vmem:[#allocation8 + $0x3c] sm:$0xf] %v441
    // Predicated region
    $region26: #{tpu_custom_call.1} parent=1 // pred_check
      _
    $region27: #{tpu_custom_call.1} parent=1 // pred_check_branch
      %475 = sbr.rel (0) target = $region29
    $region28: #{tpu_custom_call.1} parent=1 // pred_region
      %s477 = ssub.s32 1024, 1024
      %478 = vsyncadd [#allocation4], %s477
      %s479 = sshll.u32 [#allocation8], 4
      %s480 = int_to_ptr.vmem [resolvable:$true] %s479
      %485 = dma.vmem_to_hbm [thread:$0]  %s480, 1024, %s3, [#allocation4], 64, 64, 4
    $region29: #{tpu_custom_call.1} parent=1 // pred_fallthru
      _
    // Predicated region
    $region30: #{tpu_custom_call.1} parent=1 // pred_check
      _
    $region31: #{tpu_custom_call.1} parent=1 // pred_check_branch
      %487 = sbr.rel (0) target = $region33
    $region32: #{tpu_custom_call.1} parent=1 // pred_region
      %488 = dma.done [#allocation4], 1024
    $region33: #{tpu_custom_call.1} parent=1 // pred_fallthru
      _
    %489 = vsyncpa [#allocation3], 1
    %490 = vsyncpa [#allocation6], 1
    %491 = vsyncpa [#allocation4], 1

</llo_original>
